<compile_context>
chip_gen: v5e
topology: v5e:2x2
jax: 0.10.0
libtpu: 0.0.40
codegen_flags: <defaults>
</compile_context>

<pallas_src>
import functools

import jax
import jax.numpy as jnp
from jax.experimental import pallas as pl
from jax.experimental.pallas import tpu as pltpu

NEG_INF = -1e20


def _attention_head_kernel(q_ref, k_ref, v_ref, bias_ref,
                           wq_ref, bq_ref, wk_ref, bk_ref, wv_ref, bv_ref,
                           o_ref, kp_ref, vp_ref,
                           *, bt, tq, sk, inv_scale):
    f32 = jnp.float32
    qi = pl.program_id(1)

    # --- K/V projections: once per batch block (query axis is the inner,
    #     sequential grid axis); stored in matmul dtype (bf16 default) so the
    #     attention einsums read them without a per-step re-cast.
    @pl.when(qi == 0)
    def _():
        kp = jnp.dot(k_ref[...], wk_ref[...], preferred_element_type=f32) + bk_ref[...]
        vp = jnp.dot(v_ref[...], wv_ref[...], preferred_element_type=f32) + bv_ref[...]
        kp_ref[...] = kp.reshape(bt, sk, kp.shape[-1]).astype(kp_ref.dtype)
        vp_ref[...] = vp.reshape(bt, sk, vp.shape[-1]).astype(vp_ref.dtype)

    # --- Q projection for this query tile; fold 1/sqrt(dim_q) into Q
    #     (O(tq*Dq) multiply instead of an O(tq*Sk) divide).
    qp = jnp.dot(q_ref[...], wq_ref[...], preferred_element_type=f32) + bq_ref[...]
    qp = (qp * f32(inv_scale)).astype(kp_ref.dtype)
    q3 = qp.reshape(bt, tq, qp.shape[-1])

    # --- scores = Q @ K^T (contract last dims, no explicit transpose) + bias.
    scores = jnp.einsum("bqd,bkd->bqk", q3, kp_ref[...],
                        preferred_element_type=f32)            # (bt, tq, sk)
    logits = scores + bias_ref[...].astype(f32)                 # single vadd

    # --- softmax over keys, all in f32.
    m = jnp.max(logits, axis=-1, keepdims=True)
    p = jnp.exp(logits - m)
    denom = jnp.sum(p, axis=-1, keepdims=True)                  # >= exp(0) terms
    inv = pl.reciprocal(denom, approx=True)                     # EUP slot
    inv = inv * (2.0 - denom * inv)                             # one NR step -> ~f32
    attn = (p * inv).astype(vp_ref.dtype)

    # --- out = softmax @ V; dk_pad multiple of 128 -> unmasked full-lane vst.
    o_ref[...] = jnp.einsum("bqk,bkd->bqd", attn, vp_ref[...],
                            preferred_element_type=f32).astype(o_ref.dtype)


def attention_head(query, key, value, mask, params, *,
                   batch_block=None, q_block=None,
                   matmul_dtype=jnp.bfloat16):
    """query/key/value: (B, S, dim_in) f32; mask: (B, Sq, Sk), 0 => masked."""
    B, Sq, Din = query.shape
    _, Sk, _ = key.shape
    wq, bq = params["wq"], params["bq"]   # (Din, Dq), (1, Dq)
    wk, bk = params["wk"], params["bk"]   # (Din, Dq), (1, Dq)
    wv, bv = params["wv"], params["bv"]   # (Din, Dk), (1, Dk)
    Dq = wq.shape[1]
    Dk = wv.shape[1]

    # Query tile: bounds the (bt, tq, Sk) softmax working set at realistic Sq
    # (avoids vreg spills / VMEM blowup from full SxS temporaries).
    if q_block is not None:
        tq = q_block
    elif Sq % 256 == 0:
        tq = 256
    elif Sq % 128 == 0:
        tq = 128
    else:
        tq = Sq
    assert Sq % tq == 0

    # Batch tile: whole batch in one grid step when there is no query tiling
    # (amortizes per-step overhead on v5e/v6e). On v7x pass batch_block=B//2
    # so the 'parallel' batch axis can be split across both TensorCores.
    if batch_block is not None:
        bt = batch_block
    else:
        bt = B if tq == Sq else 1
    assert B % bt == 0
    assert bt == 1 or tq == Sq, "query tiling (tq < Sq) requires batch_block == 1"
    n_b = B // bt
    n_q = Sq // tq

    # Lane-dense output: pad the V-projection width to a multiple of 128 lanes.
    dk_pad = ((Dk + 127) // 128) * 128
    wv_p = jnp.pad(wv, ((0, 0), (0, dk_pad - Dk)))
    bv_p = jnp.pad(bv, ((0, 0), (0, dk_pad - Dk)))

    # bf16 MXU operands by default: cast activations + weight matrices in the
    # wrapper (halves DMA bytes / VMEM); biases stay f32 (added post f32-acc
    # dot). Zero padding columns remain exactly zero after the cast.
    q2d = query.reshape(B * Sq, Din).astype(matmul_dtype)
    k2d = key.reshape(B * Sk, Din).astype(matmul_dtype)
    v2d = value.reshape(B * Sk, Din).astype(matmul_dtype)
    wq_c = wq.astype(matmul_dtype)
    wk_c = wk.astype(matmul_dtype)
    wv_c = wv_p.astype(matmul_dtype)
    bq_f = bq.astype(jnp.float32)
    bk_f = bk.astype(jnp.float32)
    bv_f = bv_p.astype(jnp.float32)

    # Additive mask bias: 0 where kept, -1e20 where mask == 0.
    bias = jnp.where(mask == 0, jnp.float32(NEG_INF),
                     jnp.float32(0.0)).astype(matmul_dtype)

    kernel = functools.partial(
        _attention_head_kernel,
        bt=bt, tq=tq, sk=Sk, inv_scale=1.0 / float(Dq) ** 0.5)

    # Explicit VMEM budget (v7x: 64 MiB physical, 32 MiB default scoped).
    def nbytes(shape, dtype):
        n = 1
        for d in shape:
            n *= int(d)
        return n * jnp.dtype(dtype).itemsize

    vmem_needed = (
        2 * (nbytes((bt * tq, Din), matmul_dtype)            # query block (dbl-buf)
             + 2 * nbytes((bt * Sk, Din), matmul_dtype)      # key + value blocks
             + nbytes((bt, tq, Sk), matmul_dtype)            # bias block
             + nbytes((bt, tq, dk_pad), jnp.float32))        # output block
        + nbytes(wq_c.shape, matmul_dtype) + nbytes(wk_c.shape, matmul_dtype)
        + nbytes(wv_c.shape, matmul_dtype)
        + nbytes(bq_f.shape, jnp.float32) + nbytes(bk_f.shape, jnp.float32)
        + nbytes(bv_f.shape, jnp.float32)
        + nbytes((bt, Sk, Dq), matmul_dtype)                 # K-proj scratch
        + nbytes((bt, Sk, dk_pad), matmul_dtype))            # V-proj scratch
    vmem_limit = int(min(64 * 1024 * 1024,
                         max(32 * 1024 * 1024, 2 * vmem_needed)))

    # Deeper pipelining on the biggest per-step DMA (the S^2 bias) once the
    # query grid is long enough for that transfer to be exposed.
    bias_spec_kwargs = {}
    if n_q > 2:
        bias_spec_kwargs["pipeline_mode"] = pl.Buffered(3)

    out_padded = pl.pallas_call(
        kernel,
        out_shape=jax.ShapeDtypeStruct((B, Sq, dk_pad), jnp.float32),
        grid=(n_b, n_q),
        in_specs=[
            pl.BlockSpec((bt * tq, Din), lambda b, q: (b * n_q + q, 0)),   # query rows
            pl.BlockSpec((bt * Sk, Din), lambda b, q: (b, 0)),             # key rows (qi-invariant)
            pl.BlockSpec((bt * Sk, Din), lambda b, q: (b, 0)),             # value rows (qi-invariant)
            pl.BlockSpec((bt, tq, Sk), lambda b, q: (b, q, 0),
                         **bias_spec_kwargs),                              # additive mask bias
            pl.BlockSpec(wq_c.shape, lambda b, q: (0, 0)),
            pl.BlockSpec(bq_f.shape, lambda b, q: (0, 0)),
            pl.BlockSpec(wk_c.shape, lambda b, q: (0, 0)),
            pl.BlockSpec(bk_f.shape, lambda b, q: (0, 0)),
            pl.BlockSpec(wv_c.shape, lambda b, q: (0, 0)),
            pl.BlockSpec(bv_f.shape, lambda b, q: (0, 0)),
        ],
        out_specs=pl.BlockSpec((bt, tq, dk_pad), lambda b, q: (b, q, 0)),
        scratch_shapes=[
            pltpu.VMEM((bt, Sk, Dq), matmul_dtype),       # K projection, per batch block
            pltpu.VMEM((bt, Sk, dk_pad), matmul_dtype),   # V projection, per batch block
        ],
        compiler_params=pltpu.CompilerParams(
            dimension_semantics=("parallel", "arbitrary"),
            vmem_limit_bytes=vmem_limit),
    )(q2d, k2d, v2d, bias, wq_c, bq_f, wk_c, bk_f, wv_c, bv_f)

    # TODO(synk): a fused consumer could read the lane-padded (.., dk_pad)
    # slab directly and skip this full-output slice copy.
    return out_padded[..., :Dk]


def reference(query, key, value, mask, params):
    Q = query @ params["wq"] + params["bq"]
    K = key @ params["wk"] + params["bk"]
    V = value @ params["wv"] + params["bv"]
    num = jnp.einsum("bqd,bkd->bqk", Q, K)
    num = jnp.where(mask == 0, -1e20, num)
    scale = Q.shape[-1] ** 0.5
    sm = jax.nn.softmax(num / scale, axis=-1)
    return jnp.einsum("bqk,bkd->bqd", sm, V)


if __name__ == "__main__":
    # Small shapes consistent with the module: seq=8, dim_in=32, dim_q=dim_k=16.
    B, Sq, Sk, Din, Dq, Dk = 2, 8, 8, 32, 16, 16

    key0 = jax.random.PRNGKey(0)
    keys = jax.random.split(key0, 10)

    query = jax.random.normal(keys[0], (B, Sq, Din), jnp.float32)
    key_t = jax.random.normal(keys[1], (B, Sk, Din), jnp.float32)
    value = jax.random.normal(keys[2], (B, Sk, Din), jnp.float32)
    mask = (jax.random.uniform(keys[3], (B, Sq, Sk)) > 0.3).astype(jnp.float32)
    # guarantee at least one unmasked key per query row (diag unmasked)
    mask = jnp.maximum(mask, jnp.eye(Sq, Sk)[None])

    # nn.Linear-style init, weights stored pre-transposed as (in, out).
    def linear_init(k, din, dout):
        kw, kb = jax.random.split(k)
        bound = 1.0 / (din ** 0.5)
        W = jax.random.uniform(kw, (din, dout), jnp.float32, -bound, bound)
        b = jax.random.uniform(kb, (1, dout), jnp.float32, -bound, bound)
        return W, b

    wq, bq = linear_init(keys[4], Din, Dq)
    wk, bk = linear_init(keys[5], Din, Dq)
    wv, bv = linear_init(keys[6], Din, Dk)
    params = dict(wq=wq, bq=bq, wk=wk, bk=bk, wv=wv, bv=bv)

    ref = reference(query, key_t, value, mask, params)

    # Default path: bf16 MXU operands (v5e/v6e/v7x fast path), f32 accumulation
    # and f32 softmax; checked at bf16-level tolerance.
    out = jax.block_until_ready(attention_head(query, key_t, value, mask, params))
    assert out.shape == (B, Sq, Dk)
    assert jnp.allclose(out, ref, atol=5e-2, rtol=5e-2), "bf16 mismatch vs reference"

    # f32-operand path: matches the module numerics at tight tolerance
    # (scale folding + NR-refined approx reciprocal reassociate slightly).
    out_f32 = jax.block_until_ready(
        attention_head(query, key_t, value, mask, params,
                       matmul_dtype=jnp.float32))
    assert out_f32.shape == (B, Sq, Dk)
    assert jnp.allclose(out_f32, ref, atol=1e-4, rtol=1e-4), "f32 mismatch vs reference"

    # batch_block=1 exercises a parallel grid of length 2 (v7x: one batch block
    # per TensorCore) and the per-batch-block K/V scratch reset at qi == 0.
    out_bb1 = jax.block_until_ready(
        attention_head(query, key_t, value, mask, params, batch_block=1))
    assert jnp.allclose(out_bb1, ref, atol=5e-2, rtol=5e-2), "batch_block=1 mismatch"

    print("KERNEL_OK")
</pallas_src>

<mosaic_0001>
module attributes {stable_mosaic.version = 11 : i64} {
  func.func @_attention_head_kernel(%arg0: i32, %arg1: i32, %arg2: memref<16x32xbf16, #tpu.memory_space<vmem>>, %arg3: memref<16x32xbf16, #tpu.memory_space<vmem>>, %arg4: memref<16x32xbf16, #tpu.memory_space<vmem>>, %arg5: memref<2x8x8xbf16, #tpu.memory_space<vmem>>, %arg6: memref<32x16xbf16, #tpu.memory_space<vmem>>, %arg7: memref<1x16xf32, #tpu.memory_space<vmem>>, %arg8: memref<32x16xbf16, #tpu.memory_space<vmem>>, %arg9: memref<1x16xf32, #tpu.memory_space<vmem>>, %arg10: memref<32x128xbf16, #tpu.memory_space<vmem>>, %arg11: memref<1x128xf32, #tpu.memory_space<vmem>>, %arg12: memref<2x8x128xf32, #tpu.memory_space<vmem>>, %arg13: memref<2x8x16xbf16, #tpu.memory_space<vmem>>, %arg14: memref<2x8x128xbf16, #tpu.memory_space<vmem>>) attributes {dimension_semantics = [#tpu.dimension_semantics<parallel>, #tpu.dimension_semantics<arbitrary>], iteration_bounds = array<i64: 1, 1>, scalar_prefetch = 0 : i64, scratch_operands = 2 : i64, tpu.core_type = #tpu.core_type<tc>, window_params = [{transform_indices = @transform_0, window_bounds = array<i64: 16, 32>}, {transform_indices = @transform_1, window_bounds = array<i64: 16, 32>}, {transform_indices = @transform_2, window_bounds = array<i64: 16, 32>}, {transform_indices = @transform_3, window_bounds = array<i64: 2, 8, 8>}, {pipeline_mode = #tpu.pipeline_mode<synchronous>, transform_indices = @transform_4, window_bounds = array<i64: 32, 16>}, {pipeline_mode = #tpu.pipeline_mode<synchronous>, transform_indices = @transform_5, window_bounds = array<i64: 1, 16>}, {pipeline_mode = #tpu.pipeline_mode<synchronous>, transform_indices = @transform_6, window_bounds = array<i64: 32, 16>}, {pipeline_mode = #tpu.pipeline_mode<synchronous>, transform_indices = @transform_7, window_bounds = array<i64: 1, 16>}, {pipeline_mode = #tpu.pipeline_mode<synchronous>, transform_indices = @transform_8, window_bounds = array<i64: 32, 128>}, {pipeline_mode = #tpu.pipeline_mode<synchronous>, transform_indices = @transform_9, window_bounds = array<i64: 1, 128>}, {transform_indices = @transform_10, window_bounds = array<i64: 2, 8, 128>}]} {
    %c0_i32 = arith.constant 0 : i32
    %0 = arith.cmpi eq, %arg1, %c0_i32 : i32
    %1 = arith.extui %0 : i1 to i32
    %c0_i32_0 = arith.constant 0 : i32
    %2 = arith.cmpi ne, %1, %c0_i32_0 : i32
    scf.if %2 {
      %c0_24 = arith.constant 0 : index
      %c0_25 = arith.constant 0 : index
      %36 = vector.load %arg3[%c0_24, %c0_25] : memref<16x32xbf16, #tpu.memory_space<vmem>>, vector<16x32xbf16>
      %c0_26 = arith.constant 0 : index
      %c0_27 = arith.constant 0 : index
      %37 = vector.load %arg8[%c0_26, %c0_27] : memref<32x16xbf16, #tpu.memory_space<vmem>>, vector<32x16xbf16>
      %cst_28 = arith.constant dense<0.000000e+00> : vector<16x16xf32>
      %38 = tpu.matmul %36, %37, %cst_28 {dimension_numbers = #tpu.dot_dimension_numbers<[1], [0], [0], [1], [0, 0, 1, 1], [], []>} : vector<16x32xbf16>, vector<32x16xbf16>, vector<16x16xf32> -> vector<16x16xf32>
      %c0_29 = arith.constant 0 : index
      %c0_30 = arith.constant 0 : index
      %39 = vector.load %arg9[%c0_29, %c0_30] : memref<1x16xf32, #tpu.memory_space<vmem>>, vector<1x16xf32>
      %40 = vector.broadcast %39 : vector<1x16xf32> to vector<16x16xf32>
      %41 = arith.addf %38, %40 : vector<16x16xf32>
      %c0_31 = arith.constant 0 : index
      %c0_32 = arith.constant 0 : index
      %42 = vector.load %arg4[%c0_31, %c0_32] : memref<16x32xbf16, #tpu.memory_space<vmem>>, vector<16x32xbf16>
      %c0_33 = arith.constant 0 : index
      %c0_34 = arith.constant 0 : index
      %43 = vector.load %arg10[%c0_33, %c0_34] : memref<32x128xbf16, #tpu.memory_space<vmem>>, vector<32x128xbf16>
      %cst_35 = arith.constant dense<0.000000e+00> : vector<16x128xf32>
      %44 = tpu.matmul %42, %43, %cst_35 {dimension_numbers = #tpu.dot_dimension_numbers<[1], [0], [0], [1], [0, 0, 1, 1], [], []>} : vector<16x32xbf16>, vector<32x128xbf16>, vector<16x128xf32> -> vector<16x128xf32>
      %c0_36 = arith.constant 0 : index
      %c0_37 = arith.constant 0 : index
      %45 = vector.load %arg11[%c0_36, %c0_37] : memref<1x128xf32, #tpu.memory_space<vmem>>, vector<1x128xf32>
      %46 = vector.broadcast %45 : vector<1x128xf32> to vector<16x128xf32>
      %47 = arith.addf %44, %46 : vector<16x128xf32>
      %48 = vector.shape_cast %41 : vector<16x16xf32> to vector<2x8x16xf32>
      %49 = arith.truncf %48 : vector<2x8x16xf32> to vector<2x8x16xbf16>
      %c0_38 = arith.constant 0 : index
      %c0_39 = arith.constant 0 : index
      %c0_40 = arith.constant 0 : index
      %50 = vector.load %arg13[%c0_38, %c0_39, %c0_40] : memref<2x8x16xbf16, #tpu.memory_space<vmem>>, vector<2x8x16xbf16>
      tpu.vector_store %arg13[%c0_38, %c0_39, %c0_40], %49 {strides = array<i32>} : memref<2x8x16xbf16, #tpu.memory_space<vmem>>, vector<2x8x16xbf16>,
      %51 = vector.shape_cast %47 : vector<16x128xf32> to vector<2x8x128xf32>
      %52 = arith.truncf %51 : vector<2x8x128xf32> to vector<2x8x128xbf16>
      %c0_41 = arith.constant 0 : index
      %c0_42 = arith.constant 0 : index
      %c0_43 = arith.constant 0 : index
      %53 = vector.load %arg14[%c0_41, %c0_42, %c0_43] : memref<2x8x128xbf16, #tpu.memory_space<vmem>>, vector<2x8x128xbf16>
      tpu.vector_store %arg14[%c0_41, %c0_42, %c0_43], %52 {strides = array<i32>} : memref<2x8x128xbf16, #tpu.memory_space<vmem>>, vector<2x8x128xbf16>,
    } else {
    }
    %c0 = arith.constant 0 : index
    %c0_1 = arith.constant 0 : index
    %3 = vector.load %arg2[%c0, %c0_1] : memref<16x32xbf16, #tpu.memory_space<vmem>>, vector<16x32xbf16>
    %c0_2 = arith.constant 0 : index
    %c0_3 = arith.constant 0 : index
    %4 = vector.load %arg6[%c0_2, %c0_3] : memref<32x16xbf16, #tpu.memory_space<vmem>>, vector<32x16xbf16>
    %cst = arith.constant dense<0.000000e+00> : vector<16x16xf32>
    %5 = tpu.matmul %3, %4, %cst {dimension_numbers = #tpu.dot_dimension_numbers<[1], [0], [0], [1], [0, 0, 1, 1], [], []>} : vector<16x32xbf16>, vector<32x16xbf16>, vector<16x16xf32> -> vector<16x16xf32>
    %c0_4 = arith.constant 0 : index
    %c0_5 = arith.constant 0 : index
    %6 = vector.load %arg7[%c0_4, %c0_5] : memref<1x16xf32, #tpu.memory_space<vmem>>, vector<1x16xf32>
    %7 = vector.broadcast %6 : vector<1x16xf32> to vector<16x16xf32>
    %8 = arith.addf %5, %7 : vector<16x16xf32>
    %cst_6 = arith.constant 2.500000e-01 : f32
    %9 = vector.broadcast %cst_6 : f32 to vector<16x16xf32>
    %10 = arith.mulf %8, %9 : vector<16x16xf32>
    %11 = arith.truncf %10 : vector<16x16xf32> to vector<16x16xbf16>
    %12 = vector.shape_cast %11 : vector<16x16xbf16> to vector<2x8x16xbf16>
    %c0_7 = arith.constant 0 : index
    %c0_8 = arith.constant 0 : index
    %c0_9 = arith.constant 0 : index
    %13 = vector.load %arg13[%c0_7, %c0_8, %c0_9] : memref<2x8x16xbf16, #tpu.memory_space<vmem>>, vector<2x8x16xbf16>
    "tpu.trace_start"() <{level = 10 : i32, message = "bqd,bkd->bqk"}> : () -> ()
    %cst_10 = arith.constant dense<0.000000e+00> : vector<2x8x8xf32>
    %14 = tpu.matmul %12, %13, %cst_10 {dimension_numbers = #tpu.dot_dimension_numbers<[2], [2], [1], [1], [0, 0, 0, 1, 1, 1], [0], [0]>} : vector<2x8x16xbf16>, vector<2x8x16xbf16>, vector<2x8x8xf32> -> vector<2x8x8xf32>
    "tpu.trace_stop"() : () -> ()
    %c0_11 = arith.constant 0 : index
    %c0_12 = arith.constant 0 : index
    %c0_13 = arith.constant 0 : index
    %15 = vector.load %arg5[%c0_11, %c0_12, %c0_13] : memref<2x8x8xbf16, #tpu.memory_space<vmem>>, vector<2x8x8xbf16>
    %16 = arith.extf %15 : vector<2x8x8xbf16> to vector<2x8x8xf32>
    %17 = arith.addf %14, %16 : vector<2x8x8xf32>
    %cst_14 = arith.constant dense<0xFF800000> : vector<2x8xf32>
    %18 = vector.multi_reduction <maximumf>, %17, %cst_14 [2] : vector<2x8x8xf32> to vector<2x8xf32>
    %19 = vector.shape_cast %18 : vector<2x8xf32> to vector<2x8x1xf32>
    %20 = vector.broadcast %19 : vector<2x8x1xf32> to vector<2x8x8xf32>
    %21 = arith.subf %17, %20 : vector<2x8x8xf32>
    %22 = math.exp %21 : vector<2x8x8xf32>
    %cst_15 = arith.constant dense<0.000000e+00> : vector<2x8xf32>
    %23 = vector.multi_reduction <add>, %22, %cst_15 [2] : vector<2x8x8xf32> to vector<2x8xf32>
    %24 = vector.shape_cast %23 : vector<2x8xf32> to vector<2x8x1xf32>
    %25 = tpu.reciprocal %24 {approx = true} : vector<2x8x1xf32> -> vector<2x8x1xf32>
    %26 = arith.mulf %24, %25 : vector<2x8x1xf32>
    %cst_16 = arith.constant 2.000000e+00 : f32
    %27 = vector.broadcast %cst_16 : f32 to vector<2x8x1xf32>
    %28 = arith.subf %27, %26 : vector<2x8x1xf32>
    %29 = arith.mulf %25, %28 : vector<2x8x1xf32>
    %30 = vector.broadcast %29 : vector<2x8x1xf32> to vector<2x8x8xf32>
    %31 = arith.mulf %22, %30 : vector<2x8x8xf32>
    %32 = arith.truncf %31 : vector<2x8x8xf32> to vector<2x8x8xbf16>
    %c0_17 = arith.constant 0 : index
    %c0_18 = arith.constant 0 : index
    %c0_19 = arith.constant 0 : index
    %33 = vector.load %arg14[%c0_17, %c0_18, %c0_19] : memref<2x8x128xbf16, #tpu.memory_space<vmem>>, vector<2x8x128xbf16>
    "tpu.trace_start"() <{level = 10 : i32, message = "bqk,bkd->bqd"}> : () -> ()
    %cst_20 = arith.constant dense<0.000000e+00> : vector<2x8x128xf32>
    %34 = tpu.matmul %32, %33, %cst_20 {dimension_numbers = #tpu.dot_dimension_numbers<[2], [1], [1], [2], [0, 0, 0, 1, 1, 2], [0], [0]>} : vector<2x8x8xbf16>, vector<2x8x128xbf16>, vector<2x8x128xf32> -> vector<2x8x128xf32>
    "tpu.trace_stop"() : () -> ()
    %c0_21 = arith.constant 0 : index
    %c0_22 = arith.constant 0 : index
    %c0_23 = arith.constant 0 : index
    %35 = vector.load %arg12[%c0_21, %c0_22, %c0_23] : memref<2x8x128xf32, #tpu.memory_space<vmem>>, vector<2x8x128xf32>
    tpu.vector_store %arg12[%c0_21, %c0_22, %c0_23], %34 {strides = array<i32>} : memref<2x8x128xf32, #tpu.memory_space<vmem>>, vector<2x8x128xf32>,
    return
  }
  func.func @transform_0(%arg0: i32, %arg1: i32) -> (i32, i32) {
    %c1_i32 = arith.constant 1 : i32
    %0 = arith.muli %arg0, %c1_i32 : i32
    %1 = arith.addi %0, %arg1 : i32
    %c0_i32 = arith.constant 0 : i32
    %c0_i32_0 = arith.constant 0 : i32
    return %1, %c0_i32 : i32, i32
  }
  func.func @transform_1(%arg0: i32, %arg1: i32) -> (i32, i32) {
    %c0_i32 = arith.constant 0 : i32
    %c0_i32_0 = arith.constant 0 : i32
    return %arg0, %c0_i32 : i32, i32
  }
  func.func @transform_2(%arg0: i32, %arg1: i32) -> (i32, i32) {
    %c0_i32 = arith.constant 0 : i32
    %c0_i32_0 = arith.constant 0 : i32
    return %arg0, %c0_i32 : i32, i32
  }
  func.func @transform_3(%arg0: i32, %arg1: i32) -> (i32, i32, i32) {
    %c0_i32 = arith.constant 0 : i32
    %c0_i32_0 = arith.constant 0 : i32
    return %arg0, %arg1, %c0_i32 : i32, i32, i32
  }
  func.func @transform_4(%arg0: i32, %arg1: i32) -> (i32, i32) {
    %c0_i32 = arith.constant 0 : i32
    %c0_i32_0 = arith.constant 0 : i32
    %c0_i32_1 = arith.constant 0 : i32
    return %c0_i32, %c0_i32_0 : i32, i32
  }
  func.func @transform_5(%arg0: i32, %arg1: i32) -> (i32, i32) {
    %c0_i32 = arith.constant 0 : i32
    %c0_i32_0 = arith.constant 0 : i32
    %c0_i32_1 = arith.constant 0 : i32
    return %c0_i32, %c0_i32_0 : i32, i32
  }
  func.func @transform_6(%arg0: i32, %arg1: i32) -> (i32, i32) {
    %c0_i32 = arith.constant 0 : i32
    %c0_i32_0 = arith.constant 0 : i32
    %c0_i32_1 = arith.constant 0 : i32
    return %c0_i32, %c0_i32_0 : i32, i32
  }
  func.func @transform_7(%arg0: i32, %arg1: i32) -> (i32, i32) {
    %c0_i32 = arith.constant 0 : i32
    %c0_i32_0 = arith.constant 0 : i32
    %c0_i32_1 = arith.constant 0 : i32
    return %c0_i32, %c0_i32_0 : i32, i32
  }
  func.func @transform_8(%arg0: i32, %arg1: i32) -> (i32, i32) {
    %c0_i32 = arith.constant 0 : i32
    %c0_i32_0 = arith.constant 0 : i32
    %c0_i32_1 = arith.constant 0 : i32
    return %c0_i32, %c0_i32_0 : i32, i32
  }
  func.func @transform_9(%arg0: i32, %arg1: i32) -> (i32, i32) {
    %c0_i32 = arith.constant 0 : i32
    %c0_i32_0 = arith.constant 0 : i32
    %c0_i32_1 = arith.constant 0 : i32
    return %c0_i32, %c0_i32_0 : i32, i32
  }
  func.func @transform_10(%arg0: i32, %arg1: i32) -> (i32, i32, i32) {
    %c0_i32 = arith.constant 0 : i32
    %c0_i32_0 = arith.constant 0 : i32
    return %arg0, %arg1, %c0_i32 : i32, i32, i32
  }
}

</mosaic_0001>

<llo_original>
// kernel: tpu_custom_call.1
$region0: #{tpu_custom_call.1}
  #allocation0 [shape = 'u32[]', space=smem, size = 0x4, offset = 0x4, fixed_abs, tag = 'smem constant byte address 0x4 - core index']
  #allocation1 [shape = 'u32[72,128]{1,0:T(1,128)}', space=vmem, size = 0x9000, scoped, tag = 'internal scratch']
  #allocation2 [shape = 'bf16[2,8,16]{2,1,0:T(8,128)(2,1)}', space=vmem, size = 0x1000, scoped, tag = 'scratch operand']
  #allocation3 [shape = 'bf16[2,8,128]{2,1,0:T(8,128)(2,1)}', space=vmem, size = 0x1000, scoped, tag = 'scratch operand']
  %s0 = inlined_call_operand.vmem [shape: bf16[16,32], index: 0, kind: input, shape index: {}]
  %s1 = inlined_call_operand.vmem [shape: bf16[16,32], index: 1, kind: input, shape index: {}]
  %s2 = inlined_call_operand.vmem [shape: bf16[16,32], index: 2, kind: input, shape index: {}]
  %s3 = inlined_call_operand.hbm [shape: bf16[2,8,8], index: 3, kind: input, shape index: {}]
  %s4 = inlined_call_operand.vmem [shape: bf16[32,16], index: 4, kind: input, shape index: {}]
  %s5 = inlined_call_operand.vmem [shape: f32[1,16], index: 5, kind: input, shape index: {}]
  %s6 = inlined_call_operand.vmem [shape: bf16[32,16], index: 6, kind: input, shape index: {}]
  %s7 = inlined_call_operand.vmem [shape: f32[1,16], index: 7, kind: input, shape index: {}]
  %s8 = inlined_call_operand.vmem [shape: bf16[32,128], index: 8, kind: input, shape index: {}]
  %s9 = inlined_call_operand.vmem [shape: f32[1,128], index: 9, kind: input, shape index: {}]
  %s10 = inlined_call_operand.hbm [shape: f32[2,8,128], index: 10, kind: output, shape index: {}]
  %s11 = sld [smem:[#allocation0]]
  $region58: #{tpu_custom_call.1} parent=0
    _
  %s13 = ssub.s32 1, %s11
  %s14 = scalar_select 0, %s13, %s11
  $region1: #{tpu_custom_call.1} parent=0
    #allocation4 [shape = 'u8[4096]{0}', space=vmem, size = 0x1000, scoped, tag = 'input window, operand 3, single buffered']
    #allocation5 [shape = 's32[1]{0}', space=sflag, size = 0x4, scoped, tag = 'scoped memory for tpu_custom_call.1']
    #allocation6 [shape = 's32[1]{0}', space=sflag, size = 0x4, scoped, tag = 'scoped memory for tpu_custom_call.1']
    #allocation7 [shape = 'u8[8192]{0}', space=vmem, size = 0x2000, scoped, tag = 'output window, operand 0, single buffered']
    %15 = vsyncpa [#allocation5], 0
    %16 = vsyncpa [#allocation6], 0
    // Predicated region
    $region2: #{tpu_custom_call.1} parent=1 // pred_check
      _
    $region3: #{tpu_custom_call.1} parent=1 // pred_check_branch
      %18 = sbr.rel (0) target = $region5
    $region4: #{tpu_custom_call.1} parent=1 // pred_region
      %s19 = sadd.s32 0, 0
      %s20 = smul.u32 2, %s19
      %p21 = scmp.lt.s32.totalorder %s20, 1
      %s22 = scalar_select %p21, %s20, 1
      %s23 = smul.addr %s22, 4
      %s24 = scalar_lea.vmem %s0, %s23
      %s25 = sadd.s32 0, 0
      %s26 = smul.u32 2, %s25
    $region5: #{tpu_custom_call.1} parent=1 // pred_fallthru
      _
    // Predicated region
    $region6: #{tpu_custom_call.1} parent=1 // pred_check
      _
    $region7: #{tpu_custom_call.1} parent=1 // pred_check_branch
      %28 = sbr.rel (0) target = $region9
    $region8: #{tpu_custom_call.1} parent=1 // pred_region
      _
    $region9: #{tpu_custom_call.1} parent=1 // pred_fallthru
      _
    // Predicated region
    $region10: #{tpu_custom_call.1} parent=1 // pred_check
      _
    $region11: #{tpu_custom_call.1} parent=1 // pred_check_branch
      %30 = sbr.rel (0) target = $region13
    $region12: #{tpu_custom_call.1} parent=1 // pred_region
      _
    $region13: #{tpu_custom_call.1} parent=1 // pred_fallthru
      _
    // Predicated region
    $region14: #{tpu_custom_call.1} parent=1 // pred_check
      _
    $region15: #{tpu_custom_call.1} parent=1 // pred_check_branch
      %32 = sbr.rel (0) target = $region17
    $region16: #{tpu_custom_call.1} parent=1 // pred_region
      %34 = vsyncadd [#allocation5], 0
      %s35 = sshll.u32 %s3, 4
      %s36 = int_to_ptr.hbm [resolvable:$true] %s35
      %s37 = sshll.u32 [#allocation4], 4
      %s38 = int_to_ptr.vmem [resolvable:$true] %s37
      %43 = dma.hbm_to_vmem [thread:$0]  %s36, 128, %s38, [#allocation5], 64, 64, 4
    $region17: #{tpu_custom_call.1} parent=1 // pred_fallthru
      _
    // Predicated region
    $region18: #{tpu_custom_call.1} parent=1 // pred_check
      _
    $region19: #{tpu_custom_call.1} parent=1 // pred_check_branch
      %45 = sbr.rel (0) target = $region21
    $region20: #{tpu_custom_call.1} parent=1 // pred_region
      _
    $region21: #{tpu_custom_call.1} parent=1 // pred_fallthru
      _
    // Predicated region
    $region22: #{tpu_custom_call.1} parent=1 // pred_check
      _
    $region23: #{tpu_custom_call.1} parent=1 // pred_check_branch
      %47 = sbr.rel (0) target = $region25
    $region24: #{tpu_custom_call.1} parent=1 // pred_region
      _
    $region25: #{tpu_custom_call.1} parent=1 // pred_fallthru
      _
    // Predicated region
    $region26: #{tpu_custom_call.1} parent=1 // pred_check
      _
    $region27: #{tpu_custom_call.1} parent=1 // pred_check_branch
      %49 = sbr.rel (0) target = $region29
    $region28: #{tpu_custom_call.1} parent=1 // pred_region
      _
    $region29: #{tpu_custom_call.1} parent=1 // pred_fallthru
      _
    // Predicated region
    $region30: #{tpu_custom_call.1} parent=1 // pred_check
      _
    $region31: #{tpu_custom_call.1} parent=1 // pred_check_branch
      %51 = sbr.rel (0) target = $region33
    $region32: #{tpu_custom_call.1} parent=1 // pred_region
      _
    $region33: #{tpu_custom_call.1} parent=1 // pred_fallthru
      _
    // Predicated region
    $region34: #{tpu_custom_call.1} parent=1 // pred_check
      _
    $region35: #{tpu_custom_call.1} parent=1 // pred_check_branch
      %53 = sbr.rel (0) target = $region37
    $region36: #{tpu_custom_call.1} parent=1 // pred_region
      _
    $region37: #{tpu_custom_call.1} parent=1 // pred_fallthru
      _
    // Predicated region
    $region38: #{tpu_custom_call.1} parent=1 // pred_check
      _
    $region39: #{tpu_custom_call.1} parent=1 // pred_check_branch
      %55 = sbr.rel (0) target = $region41
    $region40: #{tpu_custom_call.1} parent=1 // pred_region
      _
    $region41: #{tpu_custom_call.1} parent=1 // pred_fallthru
      _
    // Predicated region
    $region42: #{tpu_custom_call.1} parent=1 // pred_check
      _
    $region43: #{tpu_custom_call.1} parent=1 // pred_check_branch
      %57 = sbr.rel (0) target = $region45
    $region44: #{tpu_custom_call.1} parent=1 // pred_region
      %59 = dma.done [#allocation5], 128
    $region45: #{tpu_custom_call.1} parent=1 // pred_fallthru
      _
    %s60 = sadd.s32 0, 0
    %s61 = smul.u32 2, %s60
    %p62 = scmp.lt.s32.totalorder %s61, 1
    %s63 = scalar_select %p62, %s61, 1
    %s64 = smul.addr %s63, 4
    %s65 = scalar_lea.vmem %s0, %s64
    %s66 = sadd.s32 0, 0
    %s67 = smul.u32 2, %s66
    %p68 = scmp.lt.s32.totalorder %s67, 1
    %s69 = scalar_select %p68, %s67, 1
    %s70 = smul.addr %s69, 4
    %s71 = scalar_lea.vmem %s0, %s70
    %s72 = sadd.s32 0, 0
    %s73 = smul.u32 2, %s72
    %p75 = scmp.eq.s32.totalorder 0, 0
    // Predicated region
    $region46: #{tpu_custom_call.1} parent=1 // pred_check
      %p76 = pneg %p75
    $region47: #{tpu_custom_call.1} parent=1 // pred_check_branch
      %78 = sbr.rel (%p76) target = $region49
    $region48: #{tpu_custom_call.1} parent=1 // pred_region
      %v79 = vld [vmem:[%s1] sm:$0xf]
      %v80 = vld [vmem:[%s1 + $0x4] sm:$0xf]
      %v81 = vld [vmem:[%s6] sm:$0xf]
      %v82 = vld [vmem:[%s6 + $0x4] sm:$0xf]
      %v83 = vld [vmem:[%s6 + $0x8] sm:$0xf]
      %v84 = vld [vmem:[%s6 + $0xc] sm:$0xf]
      %v85 = vld [vmem:[%s7] sm:$0x1]
      %v87 = vperm.slane %v85, 0
      %v91 = vunpack.c.l.b16 %v79
      %v92 = vunpack.c.l.b16 %v80
      %v93 = vpack.c.b16 %v92, %v91
      %v98 = vunpack.c.l.b16 %v81
      %v99 = vunpack.c.l.b16 %v82
      %v100 = vunpack.c.l.b16 %v83
      %v101 = vunpack.c.l.b16 %v84
      %v102 = vpack.c.b16 %v99, %v98
      %v103 = vpack.c.b16 %v101, %v100
      %vm106 = vcmask 261120
      %v108 = vsel %vm106, %v93, 0
      %110 = vmatpush.bf16.msra.mxu0 0
      %111 = vmatpush.bf16.msra.mxu0 0
      %112 = vmatpush.bf16.msra.mxu0 0
      %113 = vmatpush.bf16.msra.mxu0 0
      %114 = vmatpush.bf16.msra.mxu0 0
      %115 = vmatpush.bf16.msra.mxu0 0
      %116 = vmatpush.bf16.msra.mxu0 %v103
      %117 = vmatpush.bf16.msra.mxu0 %v102
      %118 = vmatmul.bf16.gmra.mxu0 %v108
      %v119 = vpop.f32.mrf.mxu0
      %v120 = vadd.f32 %v87, %v119
      %v121 = vpop.f32.mrf.mxu0
      %v122 = vadd.f32 %v87, %v121
      %123 = vdwg.mxu0
      %v124 = vld [vmem:[%s2] sm:$0xf]
      %v125 = vld [vmem:[%s2 + $0x4] sm:$0xf]
      %v126 = vld [vmem:[%s8] sm:$0xf]
      %v127 = vld [vmem:[%s8 + $0x4] sm:$0xf]
      %v128 = vld [vmem:[%s8 + $0x8] sm:$0xf]
      %v129 = vld [vmem:[%s8 + $0xc] sm:$0xf]
      %v130 = vld [vmem:[%s9] sm:$0x1]
      %v132 = vperm.slane %v130, 0
      %v136 = vunpack.c.l.b16 %v124
      %v137 = vunpack.c.l.b16 %v125
      %v138 = vpack.c.b16 %v137, %v136
      %v143 = vunpack.c.l.b16 %v126
      %v144 = vunpack.c.l.b16 %v127
      %v145 = vunpack.c.l.b16 %v128
      %v146 = vunpack.c.l.b16 %v129
      %v147 = vpack.c.b16 %v144, %v143
      %v148 = vpack.c.b16 %v146, %v145
      %v152 = vsel %vm106, %v138, 0
      %154 = vmatpush.bf16.msra.mxu0 0
      %155 = vmatpush.bf16.msra.mxu0 0
      %156 = vmatpush.bf16.msra.mxu0 0
      %157 = vmatpush.bf16.msra.mxu0 0
      %158 = vmatpush.bf16.msra.mxu0 0
      %159 = vmatpush.bf16.msra.mxu0 0
      %160 = vmatpush.bf16.msra.mxu0 %v148
      %161 = vmatpush.bf16.msra.mxu0 %v147
      %162 = vmatmul.bf16.gmra.mxu0 %v152
      %v163 = vpop.f32.mrf.mxu0
      %v164 = vadd.f32 %v132, %v163
      %v165 = vpop.f32.mrf.mxu0
      %v166 = vadd.f32 %v132, %v165
      %167 = vdwg.mxu0
      %v168 = vpack.c.bf16 %v120, %v120
      %v169 = vpack.c.bf16 %v122, %v122
      %vm170 = vcmask 125952
      %171 = vst.msk [vmem:[#allocation2] sm:$0xf] %vm170, %v168
      %172 = vst.msk [vmem:[#allocation2 + $0x4] sm:$0xf] %vm170, %v169
      %v173 = vpack.c.bf16 %v164, %v164
      %v174 = vpack.c.bf16 %v166, %v166
      %175 = vst [vmem:[#allocation3] sm:$0xf] %v173
      %176 = vst [vmem:[#allocation3 + $0x4] sm:$0xf] %v174
    $region49: #{tpu_custom_call.1} parent=1 // pred_fallthru
      _
    %v177 = vld [vmem:[%s71] sm:$0xf]
    %v178 = vld [vmem:[%s71 + $0x4] sm:$0xf]
    %v179 = vld [vmem:[%s4] sm:$0xf]
    %v180 = vld [vmem:[%s4 + $0x4] sm:$0xf]
    %v181 = vld [vmem:[%s4 + $0x8] sm:$0xf]
    %v182 = vld [vmem:[%s4 + $0xc] sm:$0xf]
    %v183 = vld [vmem:[%s5] sm:$0x1]
    %v185 = vperm.slane %v183, 0
    %v189 = vunpack.c.l.b16 %v177
    %v190 = vunpack.c.l.b16 %v178
    %v191 = vpack.c.b16 %v190, %v189
    %v196 = vunpack.c.l.b16 %v179
    %v197 = vunpack.c.l.b16 %v180
    %v198 = vunpack.c.l.b16 %v181
    %v199 = vunpack.c.l.b16 %v182
    %v200 = vpack.c.b16 %v197, %v196
    %v201 = vpack.c.b16 %v199, %v198
    %vm204 = vcmask 261120
    %v206 = vsel %vm204, %v191, 0
    %208 = vmatpush.bf16.msra.mxu0 0
    %209 = vmatpush.bf16.msra.mxu0 0
    %210 = vmatpush.bf16.msra.mxu0 0
    %211 = vmatpush.bf16.msra.mxu0 0
    %212 = vmatpush.bf16.msra.mxu0 0
    %213 = vmatpush.bf16.msra.mxu0 0
    %214 = vmatpush.bf16.msra.mxu0 %v201
    %215 = vmatpush.bf16.msra.mxu0 %v200
    %216 = vmatmul.bf16.gmra.mxu0 %v206
    %v217 = vpop.f32.mrf.mxu0
    %v218 = vadd.f32 %v185, %v217
    %v219 = vpop.f32.mrf.mxu0
    %v220 = vadd.f32 %v185, %v219
    %221 = vdwg.mxu0
    %v222 = vmul.f32 %v218, 0.25
    %v223 = vmul.f32 %v220, 0.25
    %v224 = vpack.c.bf16 %v222, %v222
    %v225 = vpack.c.bf16 %v223, %v223
    %v226 = vld [vmem:[#allocation2] sm:$0xf]
    %v227 = vld [vmem:[#allocation2 + $0x4] sm:$0xf]
    %v228 = vld [vmem:[#allocation4] sm:$0xf]
    %v229 = vld [vmem:[#allocation4 + $0x4] sm:$0xf]
    %v230 = vunpack.c.l.bf16 %v228
    %v231 = vunpack.c.l.bf16 %v229
    %vm232 = vcmask 130048
    %v234 = vsel %vm232, %v224, 0
    %v237 = vsel %vm232, %v226, 0
    %239 = vmatpush.bf16.xpose.msra.mxu0 0
    %240 = vmatpush.bf16.xpose.msra.mxu0 0
    %241 = vmatpush.bf16.xpose.msra.mxu0 0
    %242 = vmatpush.bf16.xpose.msra.mxu0 0
    %243 = vmatpush.bf16.xpose.msra.mxu0 0
    %244 = vmatpush.bf16.xpose.msra.mxu0 0
    %245 = vmatpush.bf16.xpose.msra.mxu0 0
    %246 = vmatpush.bf16.xpose.msra.mxu0 %v237
    %247 = vmatmul.bf16.gmra.mxu0 %v234
    %v248 = vpop.f32.mrf.mxu0
    %v249 = vadd.f32 %v230, %v248
    %v250 = vpop.f32.mrf.mxu0
    %251 = vdwg.mxu0
    %v253 = vsel %vm232, %v225, 0
    %v256 = vsel %vm232, %v227, 0
    %258 = vmatpush.bf16.xpose.msra.mxu0 0
    %259 = vmatpush.bf16.xpose.msra.mxu0 0
    %260 = vmatpush.bf16.xpose.msra.mxu0 0
    %261 = vmatpush.bf16.xpose.msra.mxu0 0
    %262 = vmatpush.bf16.xpose.msra.mxu0 0
    %263 = vmatpush.bf16.xpose.msra.mxu0 0
    %264 = vmatpush.bf16.xpose.msra.mxu0 0
    %265 = vmatpush.bf16.xpose.msra.mxu0 %v256
    %266 = vmatmul.bf16.gmra.mxu0 %v253
    %v267 = vpop.f32.mrf.mxu0
    %v268 = vadd.f32 %v231, %v267
    %v269 = vpop.f32.mrf.mxu0
    %270 = vdwg.mxu0
    %vm271 = vcmask 64512
    %v272 = vsel %vm271, %v249, -inf
    %273 = vmax.xlane.f32.xlu0 %v272
    %v274 = vpop.xlane.xlu0 %273
    %v275 = vsel %vm271, %v268, -inf
    %276 = vmax.xlane.f32.xlu0 %v275
    %v277 = vpop.xlane.xlu0 %276
    %v278 = vsub.f32 %v249, %v274
    %v279 = vsub.f32 %v268, %v277
    %v280 = vmul.f32 %v278, 1.442695
    %v281 = vpow.pop %v280
    %v282 = vmul.f32 %v279, 1.442695
    %v283 = vpow.pop %v282
    %v284 = vsel %vm271, %v281, 0.0
    %285 = vadd.xlane.f32.xlu0 %v284
    %v286 = vpop.xlane.xlu0 %285
    %v287 = vsel %vm271, %v283, 0.0
    %288 = vadd.xlane.f32.xlu0 %v287
    %v289 = vpop.xlane.xlu0 %288
    %v290 = vrcp.pop %v286
    %v291 = vrcp.pop %v289
    %v292 = vmul.f32 %v286, %v290
    %v293 = vmul.f32 %v289, %v291
    %v294 = vsub.f32 2.0, %v292
    %v295 = vsub.f32 2.0, %v293
    %v296 = vmul.f32 %v290, %v294
    %v297 = vmul.f32 %v291, %v295
    %v298 = vmul.f32 %v281, %v296
    %v299 = vmul.f32 %v283, %v297
    %v300 = vpack.c.bf16 %v298, %v298
    %v301 = vpack.c.bf16 %v299, %v299
    %v302 = vld [vmem:[#allocation3] sm:$0xf]
    %v303 = vld [vmem:[#allocation3 + $0x4] sm:$0xf]
    %v305 = vsel %vm271, %v300, 0
    %vm307 = vcmask 1043456
    %v309 = vsel %vm307, %v302, 0
    %311 = vmatpush.bf16.msra.mxu0 0
    %312 = vmatpush.bf16.msra.mxu0 0
    %313 = vmatpush.bf16.msra.mxu0 0
    %314 = vmatpush.bf16.msra.mxu0 0
    %315 = vmatpush.bf16.msra.mxu0 0
    %316 = vmatpush.bf16.msra.mxu0 0
    %317 = vmatpush.bf16.msra.mxu0 0
    %318 = vmatpush.bf16.msra.mxu0 %v309
    %319 = vmatmul.bf16.gmra.mxu0 %v305
    %v320 = vpop.f32.mrf.mxu0
    %v321 = vadd.f32 0.0, %v320
    %v322 = vpop.f32.mrf.mxu0
    %323 = vdwg.mxu0
    %v325 = vsel %vm271, %v301, 0
    %v328 = vsel %vm307, %v303, 0
    %330 = vmatpush.bf16.msra.mxu0 0
    %331 = vmatpush.bf16.msra.mxu0 0
    %332 = vmatpush.bf16.msra.mxu0 0
    %333 = vmatpush.bf16.msra.mxu0 0
    %334 = vmatpush.bf16.msra.mxu0 0
    %335 = vmatpush.bf16.msra.mxu0 0
    %336 = vmatpush.bf16.msra.mxu0 0
    %337 = vmatpush.bf16.msra.mxu0 %v328
    %338 = vmatmul.bf16.gmra.mxu0 %v325
    %v339 = vpop.f32.mrf.mxu0
    %v340 = vadd.f32 0.0, %v339
    %v341 = vpop.f32.mrf.mxu0
    %342 = vdwg.mxu0
    %343 = vst [vmem:[#allocation7] sm:$0xff] %v321
    %344 = vst [vmem:[#allocation7 + $0x8] sm:$0xff] %v340
    // Predicated region
    $region50: #{tpu_custom_call.1} parent=1 // pred_check
      _
    $region51: #{tpu_custom_call.1} parent=1 // pred_check_branch
      %346 = sbr.rel (0) target = $region53
    $region52: #{tpu_custom_call.1} parent=1 // pred_region
      %348 = vsyncadd [#allocation6], 0
      %s349 = sshll.u32 [#allocation7], 4
      %s350 = int_to_ptr.vmem [resolvable:$true] %s349
      %s351 = sshll.u32 %s10, 4
      %s352 = int_to_ptr.hbm [resolvable:$true] %s351
      %357 = dma.vmem_to_hbm [thread:$0]  %s350, 256, %s352, [#allocation6], 128, 128, 8
    $region53: #{tpu_custom_call.1} parent=1 // pred_fallthru
      _
    // Predicated region
    $region54: #{tpu_custom_call.1} parent=1 // pred_check
      _
    $region55: #{tpu_custom_call.1} parent=1 // pred_check_branch
      %359 = sbr.rel (0) target = $region57
    $region56: #{tpu_custom_call.1} parent=1 // pred_region
      %361 = dma.done [#allocation6], 256
    $region57: #{tpu_custom_call.1} parent=1 // pred_fallthru
      _
    %362 = vsyncpa [#allocation5], 1
    %363 = vsyncpa [#allocation6], 1

</llo_original>
